<compile_context>
chip_gen: v5e
topology: v5e:2x2
jax: 0.10.0
libtpu: 0.0.40
codegen_flags: <defaults>
</compile_context>

<pallas_src>
from functools import partial

import jax
import jax.numpy as jnp
from jax import lax
from jax.experimental import pallas as pl
from jax.experimental.pallas import tpu as pltpu


def _round_up(x, m):
    return ((x + m - 1) // m) * m


def _dtype_bytes(dt):
    return jnp.dtype(dt).itemsize


def _tpu_kind():
    try:
        return jax.devices()[0].device_kind.lower()
    except Exception:
        return ""


# ---------------------------------------------------------------------------
# Kernel
# ---------------------------------------------------------------------------
def opinion_kernel(a_width, a_lane_width,
                   x_ref, w1_ref, b1_ref, w2_ref, b2_ref, w3_ref, b3_ref,
                   out_ref):
    """One batch tile of the MLP + head.  Head columns are pre-permuted on the
    host to the grouped [A | b | c | zero-pad] layout."""
    # MXU matmuls in the params' dtype (bf16), f32 accumulation; biases in f32.
    h1 = jnp.dot(x_ref[...], w1_ref[...], preferred_element_type=jnp.float32)
    h1 = jnp.maximum(h1 + b1_ref[...], 0.0)
    h2 = jnp.dot(h1.astype(w2_ref.dtype), w2_ref[...],
                 preferred_element_type=jnp.float32)
    h2 = jnp.maximum(h2 + b2_ref[...], 0.0)
    abc = jnp.dot(h2.astype(w3_ref.dtype), w3_ref[...],
                  preferred_element_type=jnp.float32) + b3_ref[...]

    out_pad = abc.shape[1]
    if a_lane_width >= out_pad:
        # A block spans (part of) the only lane group: whole-tile exp + select.
        col = lax.broadcasted_iota(jnp.int32, abc.shape, dimension=1)
        out = jnp.where(col < a_width, jnp.exp(abc), abc)
    else:
        # Only exp the leading 128-lane group(s) that contain the A block; the
        # remaining b/c lanes pass straight through (saves EUP pushes).
        head = abc[:, :a_lane_width]
        col = lax.broadcasted_iota(jnp.int32, head.shape, dimension=1)
        head = jnp.where(col < a_width, jnp.exp(head), head)
        out = jnp.concatenate([head, abc[:, a_lane_width:]], axis=1)

    out_ref[...] = out.astype(out_ref.dtype)   # single wide unmasked store (bf16)


# ---------------------------------------------------------------------------
# Host-side parameter packing (one-time)
# ---------------------------------------------------------------------------
def pack_params(params, *, nr_agents, nr_betas, compute_dtype=jnp.bfloat16):
    """Permute head columns to grouped [A | b | c], zero-pad to 128 lanes, cast
    matmul operands to `compute_dtype` (bf16 = MXU native, halves DMA) and keep
    biases in f32 (they are added to the f32 accumulators in-kernel)."""
    w1, b1, w2, b2, w3, b3 = params
    block = 2 * nr_agents + 1
    a_idx = jnp.concatenate(
        [j * block + 1 + jnp.arange(nr_agents) for j in range(nr_betas)])
    b_idx = jnp.concatenate(
        [j * block + 1 + nr_agents + jnp.arange(nr_agents) for j in range(nr_betas)])
    c_idx = jnp.arange(nr_betas) * block
    perm = jnp.concatenate([a_idx, b_idx, c_idx])

    packed_width = int(perm.shape[0])            # 2*nr_betas*nr_agents + nr_betas
    out_pad = _round_up(packed_width, 128)       # lane-dense output width
    hidden = w3.shape[0]

    w3p = jnp.zeros((hidden, out_pad), w3.dtype).at[:, :packed_width].set(w3[:, perm])
    b3p = jnp.zeros((1, out_pad), jnp.float32).at[:, :packed_width].set(
        b3[:, perm].astype(jnp.float32))

    return (w1.astype(compute_dtype), b1.astype(jnp.float32),
            w2.astype(compute_dtype), b2.astype(jnp.float32),
            w3p.astype(compute_dtype), b3p)


# ---------------------------------------------------------------------------
# Batch tiling (generation-aware)
# ---------------------------------------------------------------------------
def _choose_batch_tile(batch, block_b, kind):
    is_v7x = "v7" in kind
    is_v5e = ("v5 lite" in kind) or ("v5e" in kind) or ("v5litepod" in kind)
    mxu_align = 128 if is_v5e else 256
    min_steps = 2 if is_v7x else 1               # feed both TCs on v7x
    n = max(pl.cdiv(batch, block_b), min_steps)
    tb = pl.cdiv(batch, n)
    unit = mxu_align if tb >= mxu_align else 16  # 16 = bf16 sublane pack
    tb = _round_up(tb, unit)
    return tb, n, is_v7x


def split_packed(packed, *, nr_agents, nr_betas):
    """Cheap post-kernel split.  Consumers that can read the packed layout
    directly should use return_packed=True and skip this extra HBM pass."""
    ab = nr_betas * nr_agents
    B = packed.shape[0]
    A_diag = packed[:, :ab].reshape(B, nr_betas, nr_agents)
    b_vec = packed[:, ab:2 * ab].reshape(B, nr_betas, nr_agents)
    c = packed[:, 2 * ab:2 * ab + nr_betas]
    return A_diag, b_vec, c


# ---------------------------------------------------------------------------
# Forward wrapper
# ---------------------------------------------------------------------------
def opinion_net_forward(x, packed_params, *, nr_agents, nr_betas,
                        block_b=2048, out_dtype=jnp.bfloat16,
                        return_packed=False):
    w1, b1, w2, b2, w3p, b3p = packed_params
    batch = x.shape[0]
    hidden = w1.shape[1]
    out_pad = w3p.shape[1]
    ab = nr_betas * nr_agents                    # width of the A block
    a_lane_width = min(_round_up(ab, 128), out_pad)

    kind = _tpu_kind()
    tb, n_steps, is_v7x = _choose_batch_tile(batch, block_b, kind)
    b_pad = tb * n_steps

    x = x.astype(w1.dtype)                       # bf16 MXU operand, halves x DMA
    if b_pad != batch:
        x = jnp.pad(x, ((0, b_pad - batch), (0, 0)))

    # VMEM budget: double-buffered x/out tiles, params (1-2 buffers), f32
    # intermediates.  Cap generation-aware (v7x: 64 MiB physical VMEM).
    param_bytes = sum(int(p.size) * _dtype_bytes(p.dtype) for p in packed_params)
    work = (2 * tb * nr_agents * _dtype_bytes(x.dtype)
            + 2 * tb * out_pad * _dtype_bytes(out_dtype)
            + 2 * param_bytes
            + tb * (2 * hidden + 2 * out_pad) * 4)
    cap = (48 << 20) if is_v7x else (100 << 20)
    vmem_limit = int(min(cap, max(32 << 20, 2 * work)))

    flops = 2 * b_pad * (nr_agents * hidden + hidden * hidden + hidden * out_pad)
    bytes_accessed = (b_pad * nr_agents * _dtype_bytes(x.dtype)
                      + b_pad * out_pad * _dtype_bytes(out_dtype)
                      + param_bytes)
    cost = pl.CostEstimate(flops=flops,
                           transcendentals=b_pad * a_lane_width,
                           bytes_accessed=bytes_accessed)

    kernel = partial(opinion_kernel, ab, a_lane_width)
    const2 = lambda i: (0, 0)

    def call(single_buffer_weights):
        if single_buffer_weights:
            w_spec = lambda s: pl.BlockSpec(s, const2, pipeline_mode=pl.Buffered(1))
        else:
            w_spec = lambda s: pl.BlockSpec(s, const2)
        return pl.pallas_call(
            kernel,
            out_shape=jax.ShapeDtypeStruct((b_pad, out_pad), out_dtype),
            grid=(n_steps,),
            in_specs=[
                pl.BlockSpec((tb, nr_agents), lambda i: (i, 0)),   # x (batch-tiled)
                w_spec(w1.shape), w_spec(b1.shape),                # resident weights
                w_spec(w2.shape), w_spec(b2.shape),
                w_spec(w3p.shape), w_spec(b3p.shape),
            ],
            out_specs=pl.BlockSpec((tb, out_pad), lambda i: (i, 0)),
            compiler_params=pltpu.CompilerParams(
                dimension_semantics=("parallel",),                 # megacore on v7x
                vmem_limit_bytes=vmem_limit),
            cost_estimate=cost,
        )(x, w1, b1, w2, b2, w3p, b3p)

    try:
        packed = call(True)
    except Exception:
        # TODO(synk): pl.Buffered(1) (single-buffered resident constants) not
        # supported on this jax version; fall back to default double buffering.
        packed = call(False)

    if return_packed:
        return packed[:batch]
    return split_packed(packed[:batch], nr_agents=nr_agents, nr_betas=nr_betas)


# ---------------------------------------------------------------------------
# Init / reference (pure JAX, mirrors the PyTorch module)
# ---------------------------------------------------------------------------
def init_params(key, nr_agents, nr_betas, hidden):
    """PyTorch-style uniform(-1/sqrt(fan_in), 1/sqrt(fan_in)) init."""
    block = 2 * nr_agents + 1
    out_dim = nr_betas * block
    ks = jax.random.split(key, 6)

    def lin(kw, kb, fan_in, fan_out):
        bound = 1.0 / jnp.sqrt(jnp.float32(fan_in))
        w = jax.random.uniform(kw, (fan_in, fan_out), jnp.float32, -bound, bound)
        b = jax.random.uniform(kb, (1, fan_out), jnp.float32, -bound, bound)
        return w, b

    w1, b1 = lin(ks[0], ks[1], nr_agents, hidden)
    w2, b2 = lin(ks[2], ks[3], hidden, hidden)
    w3, b3 = lin(ks[4], ks[5], hidden, out_dim)

    # __init__ tweak: zero the 'c' bias slot for each beta.
    c_idx = jnp.arange(nr_betas) * block
    b3 = b3.at[0, c_idx].set(0.0)
    return (w1, b1, w2, b2, w3, b3)


def reference_forward(x, params, *, nr_agents, nr_betas):
    w1, b1, w2, b2, w3, b3 = params
    block = 2 * nr_agents + 1
    h1 = jnp.maximum(x @ w1 + b1, 0.0)
    h2 = jnp.maximum(h1 @ w2 + b2, 0.0)
    abc = (h2 @ w3 + b3).reshape(-1, nr_betas, block)
    A_diag = jnp.exp(abc[:, :, 1:nr_agents + 1])
    b = abc[:, :, nr_agents + 1:]
    c = abc[:, :, 0]
    return A_diag, b, c


if __name__ == "__main__":
    nr_agents = 8
    nr_betas = 2
    hidden = 32
    batch = 4

    key = jax.random.PRNGKey(0)
    k_params, k_x = jax.random.split(key)

    params = init_params(k_params, nr_agents, nr_betas, hidden)
    x = jax.random.normal(k_x, (batch, nr_agents), dtype=jnp.float32)

    # One-time host-side head re-layout + bf16 cast of MXU operands.
    packed_params = pack_params(params, nr_agents=nr_agents, nr_betas=nr_betas)

    A_diag, b_vec, c = opinion_net_forward(
        x, packed_params, nr_agents=nr_agents, nr_betas=nr_betas)
    jax.block_until_ready((A_diag, b_vec, c))

    # Sanity-check against the pure-JAX f32 reference (bf16 operands + bf16
    # packed output store -> looser tolerance than pure f32).
    A_ref, b_ref_, c_ref = reference_forward(
        x, params, nr_agents=nr_agents, nr_betas=nr_betas)
    assert A_diag.shape == (batch, nr_betas, nr_agents)
    assert b_vec.shape == (batch, nr_betas, nr_agents)
    assert c.shape == (batch, nr_betas)
    tol = dict(atol=5e-2, rtol=5e-2)
    assert jnp.allclose(A_diag.astype(jnp.float32), A_ref, **tol)
    assert jnp.allclose(b_vec.astype(jnp.float32), b_ref_, **tol)
    assert jnp.allclose(c.astype(jnp.float32), c_ref, **tol)

    print("KERNEL_OK")
</pallas_src>

<mosaic_0001>
module attributes {stable_mosaic.version = 11 : i64} {
  func.func @opinion_kernel(%arg0: i32, %arg1: memref<16x8xbf16, #tpu.memory_space<vmem>>, %arg2: memref<8x32xbf16, #tpu.memory_space<vmem>>, %arg3: memref<1x32xf32, #tpu.memory_space<vmem>>, %arg4: memref<32x32xbf16, #tpu.memory_space<vmem>>, %arg5: memref<1x32xf32, #tpu.memory_space<vmem>>, %arg6: memref<32x128xbf16, #tpu.memory_space<vmem>>, %arg7: memref<1x128xf32, #tpu.memory_space<vmem>>, %arg8: memref<16x128xbf16, #tpu.memory_space<vmem>>) attributes {dimension_semantics = [#tpu.dimension_semantics<parallel>], iteration_bounds = array<i64: 1>, scalar_prefetch = 0 : i64, scratch_operands = 0 : i64, tpu.core_type = #tpu.core_type<tc>, window_params = [{transform_indices = @transform_0, window_bounds = array<i64: 16, 8>}, {pipeline_mode = #tpu.pipeline_mode<synchronous>, transform_indices = @transform_1, window_bounds = array<i64: 8, 32>}, {pipeline_mode = #tpu.pipeline_mode<synchronous>, transform_indices = @transform_2, window_bounds = array<i64: 1, 32>}, {pipeline_mode = #tpu.pipeline_mode<synchronous>, transform_indices = @transform_3, window_bounds = array<i64: 32, 32>}, {pipeline_mode = #tpu.pipeline_mode<synchronous>, transform_indices = @transform_4, window_bounds = array<i64: 1, 32>}, {pipeline_mode = #tpu.pipeline_mode<synchronous>, transform_indices = @transform_5, window_bounds = array<i64: 32, 128>}, {pipeline_mode = #tpu.pipeline_mode<synchronous>, transform_indices = @transform_6, window_bounds = array<i64: 1, 128>}, {transform_indices = @transform_7, window_bounds = array<i64: 16, 128>}]} {
    %c0 = arith.constant 0 : index
    %c0_0 = arith.constant 0 : index
    %0 = vector.load %arg1[%c0, %c0_0] : memref<16x8xbf16, #tpu.memory_space<vmem>>, vector<16x8xbf16>
    %c0_1 = arith.constant 0 : index
    %c0_2 = arith.constant 0 : index
    %1 = vector.load %arg2[%c0_1, %c0_2] : memref<8x32xbf16, #tpu.memory_space<vmem>>, vector<8x32xbf16>
    %cst = arith.constant dense<0.000000e+00> : vector<16x32xf32>
    %2 = tpu.matmul %0, %1, %cst {dimension_numbers = #tpu.dot_dimension_numbers<[1], [0], [0], [1], [0, 0, 1, 1], [], []>} : vector<16x8xbf16>, vector<8x32xbf16>, vector<16x32xf32> -> vector<16x32xf32>
    %c0_3 = arith.constant 0 : index
    %c0_4 = arith.constant 0 : index
    %3 = vector.load %arg3[%c0_3, %c0_4] : memref<1x32xf32, #tpu.memory_space<vmem>>, vector<1x32xf32>
    %4 = vector.broadcast %3 : vector<1x32xf32> to vector<16x32xf32>
    %5 = arith.addf %2, %4 : vector<16x32xf32>
    %cst_5 = arith.constant 0.000000e+00 : f32
    %6 = vector.broadcast %cst_5 : f32 to vector<16x32xf32>
    %7 = arith.maximumf %5, %6 : vector<16x32xf32>
    %8 = arith.truncf %7 : vector<16x32xf32> to vector<16x32xbf16>
    %c0_6 = arith.constant 0 : index
    %c0_7 = arith.constant 0 : index
    %9 = vector.load %arg4[%c0_6, %c0_7] : memref<32x32xbf16, #tpu.memory_space<vmem>>, vector<32x32xbf16>
    %cst_8 = arith.constant dense<0.000000e+00> : vector<16x32xf32>
    %10 = tpu.matmul %8, %9, %cst_8 {dimension_numbers = #tpu.dot_dimension_numbers<[1], [0], [0], [1], [0, 0, 1, 1], [], []>} : vector<16x32xbf16>, vector<32x32xbf16>, vector<16x32xf32> -> vector<16x32xf32>
    %c0_9 = arith.constant 0 : index
    %c0_10 = arith.constant 0 : index
    %11 = vector.load %arg5[%c0_9, %c0_10] : memref<1x32xf32, #tpu.memory_space<vmem>>, vector<1x32xf32>
    %12 = vector.broadcast %11 : vector<1x32xf32> to vector<16x32xf32>
    %13 = arith.addf %10, %12 : vector<16x32xf32>
    %cst_11 = arith.constant 0.000000e+00 : f32
    %14 = vector.broadcast %cst_11 : f32 to vector<16x32xf32>
    %15 = arith.maximumf %13, %14 : vector<16x32xf32>
    %16 = arith.truncf %15 : vector<16x32xf32> to vector<16x32xbf16>
    %c0_12 = arith.constant 0 : index
    %c0_13 = arith.constant 0 : index
    %17 = vector.load %arg6[%c0_12, %c0_13] : memref<32x128xbf16, #tpu.memory_space<vmem>>, vector<32x128xbf16>
    %cst_14 = arith.constant dense<0.000000e+00> : vector<16x128xf32>
    %18 = tpu.matmul %16, %17, %cst_14 {dimension_numbers = #tpu.dot_dimension_numbers<[1], [0], [0], [1], [0, 0, 1, 1], [], []>} : vector<16x32xbf16>, vector<32x128xbf16>, vector<16x128xf32> -> vector<16x128xf32>
    %c0_15 = arith.constant 0 : index
    %c0_16 = arith.constant 0 : index
    %19 = vector.load %arg7[%c0_15, %c0_16] : memref<1x128xf32, #tpu.memory_space<vmem>>, vector<1x128xf32>
    %20 = vector.broadcast %19 : vector<1x128xf32> to vector<16x128xf32>
    %21 = arith.addf %18, %20 : vector<16x128xf32>
    %22 = tpu.iota {dimensions = array<i32: 1>} : vector<16x128xi32>
    %c16_i32 = arith.constant 16 : i32
    %23 = vector.broadcast %c16_i32 : i32 to vector<16x128xi32>
    %24 = arith.cmpi slt, %22, %23 : vector<16x128xi32>
    %25 = math.exp %21 : vector<16x128xf32>
    %26 = arith.select %24, %25, %21 : vector<16x128xi1>, vector<16x128xf32>
    %27 = arith.truncf %26 : vector<16x128xf32> to vector<16x128xbf16>
    %c0_17 = arith.constant 0 : index
    %c0_18 = arith.constant 0 : index
    %28 = vector.load %arg8[%c0_17, %c0_18] : memref<16x128xbf16, #tpu.memory_space<vmem>>, vector<16x128xbf16>
    tpu.vector_store %arg8[%c0_17, %c0_18], %27 {strides = array<i32>} : memref<16x128xbf16, #tpu.memory_space<vmem>>, vector<16x128xbf16>,
    return
  }
  func.func @transform_0(%arg0: i32) -> (i32, i32) {
    %c0_i32 = arith.constant 0 : i32
    %c0_i32_0 = arith.constant 0 : i32
    return %arg0, %c0_i32 : i32, i32
  }
  func.func @transform_1(%arg0: i32) -> (i32, i32) {
    %c0_i32 = arith.constant 0 : i32
    %c0_i32_0 = arith.constant 0 : i32
    %c0_i32_1 = arith.constant 0 : i32
    return %c0_i32, %c0_i32_0 : i32, i32
  }
  func.func @transform_2(%arg0: i32) -> (i32, i32) {
    %c0_i32 = arith.constant 0 : i32
    %c0_i32_0 = arith.constant 0 : i32
    %c0_i32_1 = arith.constant 0 : i32
    return %c0_i32, %c0_i32_0 : i32, i32
  }
  func.func @transform_3(%arg0: i32) -> (i32, i32) {
    %c0_i32 = arith.constant 0 : i32
    %c0_i32_0 = arith.constant 0 : i32
    %c0_i32_1 = arith.constant 0 : i32
    return %c0_i32, %c0_i32_0 : i32, i32
  }
  func.func @transform_4(%arg0: i32) -> (i32, i32) {
    %c0_i32 = arith.constant 0 : i32
    %c0_i32_0 = arith.constant 0 : i32
    %c0_i32_1 = arith.constant 0 : i32
    return %c0_i32, %c0_i32_0 : i32, i32
  }
  func.func @transform_5(%arg0: i32) -> (i32, i32) {
    %c0_i32 = arith.constant 0 : i32
    %c0_i32_0 = arith.constant 0 : i32
    %c0_i32_1 = arith.constant 0 : i32
    return %c0_i32, %c0_i32_0 : i32, i32
  }
  func.func @transform_6(%arg0: i32) -> (i32, i32) {
    %c0_i32 = arith.constant 0 : i32
    %c0_i32_0 = arith.constant 0 : i32
    %c0_i32_1 = arith.constant 0 : i32
    return %c0_i32, %c0_i32_0 : i32, i32
  }
  func.func @transform_7(%arg0: i32) -> (i32, i32) {
    %c0_i32 = arith.constant 0 : i32
    %c0_i32_0 = arith.constant 0 : i32
    return %arg0, %c0_i32 : i32, i32
  }
}

module attributes {stable_mosaic.version = 11 : i64} {
  func.func @opinion_kernel(%arg0: i32, %arg1: memref<16x8xbf16, #tpu.memory_space<vmem>>, %arg2: memref<8x32xbf16, #tpu.memory_space<vmem>>, %arg3: memref<1x32xf32, #tpu.memory_space<vmem>>, %arg4: memref<32x32xbf16, #tpu.memory_space<vmem>>, %arg5: memref<1x32xf32, #tpu.memory_space<vmem>>, %arg6: memref<32x128xbf16, #tpu.memory_space<vmem>>, %arg7: memref<1x128xf32, #tpu.memory_space<vmem>>, %arg8: memref<16x128xbf16, #tpu.memory_space<vmem>>) attributes {dimension_semantics = [#tpu.dimension_semantics<parallel>], iteration_bounds = array<i64: 1>, scalar_prefetch = 0 : i64, scratch_operands = 0 : i64, tpu.core_type = #tpu.core_type<tc>, window_params = [{transform_indices = @transform_0, window_bounds = array<i64: 16, 8>}, {pipeline_mode = #tpu.pipeline_mode<synchronous>, transform_indices = @transform_1, window_bounds = array<i64: 8, 32>}, {pipeline_mode = #tpu.pipeline_mode<synchronous>, transform_indices = @transform_2, window_bounds = array<i64: 1, 32>}, {pipeline_mode = #tpu.pipeline_mode<synchronous>, transform_indices = @transform_3, window_bounds = array<i64: 32, 32>}, {pipeline_mode = #tpu.pipeline_mode<synchronous>, transform_indices = @transform_4, window_bounds = array<i64: 1, 32>}, {pipeline_mode = #tpu.pipeline_mode<synchronous>, transform_indices = @transform_5, window_bounds = array<i64: 32, 128>}, {pipeline_mode = #tpu.pipeline_mode<synchronous>, transform_indices = @transform_6, window_bounds = array<i64: 1, 128>}, {transform_indices = @transform_7, window_bounds = array<i64: 16, 128>}]} {
    %c0 = arith.constant 0 : index
    %c0_0 = arith.constant 0 : index
    %0 = vector.load %arg1[%c0, %c0_0] : memref<16x8xbf16, #tpu.memory_space<vmem>>, vector<16x8xbf16>
    %c0_1 = arith.constant 0 : index
    %c0_2 = arith.constant 0 : index
    %1 = vector.load %arg2[%c0_1, %c0_2] : memref<8x32xbf16, #tpu.memory_space<vmem>>, vector<8x32xbf16>
    %cst = arith.constant dense<0.000000e+00> : vector<16x32xf32>
    %2 = tpu.matmul %0, %1, %cst {dimension_numbers = #tpu.dot_dimension_numbers<[1], [0], [0], [1], [0, 0, 1, 1], [], []>} : vector<16x8xbf16>, vector<8x32xbf16>, vector<16x32xf32> -> vector<16x32xf32>
    %c0_3 = arith.constant 0 : index
    %c0_4 = arith.constant 0 : index
    %3 = vector.load %arg3[%c0_3, %c0_4] : memref<1x32xf32, #tpu.memory_space<vmem>>, vector<1x32xf32>
    %4 = vector.broadcast %3 : vector<1x32xf32> to vector<16x32xf32>
    %5 = arith.addf %2, %4 : vector<16x32xf32>
    %cst_5 = arith.constant 0.000000e+00 : f32
    %6 = vector.broadcast %cst_5 : f32 to vector<16x32xf32>
    %7 = arith.maximumf %5, %6 : vector<16x32xf32>
    %8 = arith.truncf %7 : vector<16x32xf32> to vector<16x32xbf16>
    %c0_6 = arith.constant 0 : index
    %c0_7 = arith.constant 0 : index
    %9 = vector.load %arg4[%c0_6, %c0_7] : memref<32x32xbf16, #tpu.memory_space<vmem>>, vector<32x32xbf16>
    %cst_8 = arith.constant dense<0.000000e+00> : vector<16x32xf32>
    %10 = tpu.matmul %8, %9, %cst_8 {dimension_numbers = #tpu.dot_dimension_numbers<[1], [0], [0], [1], [0, 0, 1, 1], [], []>} : vector<16x32xbf16>, vector<32x32xbf16>, vector<16x32xf32> -> vector<16x32xf32>
    %c0_9 = arith.constant 0 : index
    %c0_10 = arith.constant 0 : index
    %11 = vector.load %arg5[%c0_9, %c0_10] : memref<1x32xf32, #tpu.memory_space<vmem>>, vector<1x32xf32>
    %12 = vector.broadcast %11 : vector<1x32xf32> to vector<16x32xf32>
    %13 = arith.addf %10, %12 : vector<16x32xf32>
    %cst_11 = arith.constant 0.000000e+00 : f32
    %14 = vector.broadcast %cst_11 : f32 to vector<16x32xf32>
    %15 = arith.maximumf %13, %14 : vector<16x32xf32>
    %16 = arith.truncf %15 : vector<16x32xf32> to vector<16x32xbf16>
    %c0_12 = arith.constant 0 : index
    %c0_13 = arith.constant 0 : index
    %17 = vector.load %arg6[%c0_12, %c0_13] : memref<32x128xbf16, #tpu.memory_space<vmem>>, vector<32x128xbf16>
    %cst_14 = arith.constant dense<0.000000e+00> : vector<16x128xf32>
    %18 = tpu.matmul %16, %17, %cst_14 {dimension_numbers = #tpu.dot_dimension_numbers<[1], [0], [0], [1], [0, 0, 1, 1], [], []>} : vector<16x32xbf16>, vector<32x128xbf16>, vector<16x128xf32> -> vector<16x128xf32>
    %c0_15 = arith.constant 0 : index
    %c0_16 = arith.constant 0 : index
    %19 = vector.load %arg7[%c0_15, %c0_16] : memref<1x128xf32, #tpu.memory_space<vmem>>, vector<1x128xf32>
    %20 = vector.broadcast %19 : vector<1x128xf32> to vector<16x128xf32>
    %21 = arith.addf %18, %20 : vector<16x128xf32>
    %22 = tpu.iota {dimensions = array<i32: 1>} : vector<16x128xi32>
    %c16_i32 = arith.constant 16 : i32
    %23 = vector.broadcast %c16_i32 : i32 to vector<16x128xi32>
    %24 = arith.cmpi slt, %22, %23 : vector<16x128xi32>
    %25 = math.exp %21 : vector<16x128xf32>
    %26 = arith.select %24, %25, %21 : vector<16x128xi1>, vector<16x128xf32>
    %27 = arith.truncf %26 : vector<16x128xf32> to vector<16x128xbf16>
    %c0_17 = arith.constant 0 : index
    %c0_18 = arith.constant 0 : index
    %28 = vector.load %arg8[%c0_17, %c0_18] : memref<16x128xbf16, #tpu.memory_space<vmem>>, vector<16x128xbf16>
    tpu.vector_store %arg8[%c0_17, %c0_18], %27 {strides = array<i32>} : memref<16x128xbf16, #tpu.memory_space<vmem>>, vector<16x128xbf16>,
    return
  }
  func.func @transform_0(%arg0: i32) -> (i32, i32) {
    %c0_i32 = arith.constant 0 : i32
    %c0_i32_0 = arith.constant 0 : i32
    return %arg0, %c0_i32 : i32, i32
  }
  func.func @transform_1(%arg0: i32) -> (i32, i32) {
    %c0_i32 = arith.constant 0 : i32
    %c0_i32_0 = arith.constant 0 : i32
    %c0_i32_1 = arith.constant 0 : i32
    return %c0_i32, %c0_i32_0 : i32, i32
  }
  func.func @transform_2(%arg0: i32) -> (i32, i32) {
    %c0_i32 = arith.constant 0 : i32
    %c0_i32_0 = arith.constant 0 : i32
    %c0_i32_1 = arith.constant 0 : i32
    return %c0_i32, %c0_i32_0 : i32, i32
  }
  func.func @transform_3(%arg0: i32) -> (i32, i32) {
    %c0_i32 = arith.constant 0 : i32
    %c0_i32_0 = arith.constant 0 : i32
    %c0_i32_1 = arith.constant 0 : i32
    return %c0_i32, %c0_i32_0 : i32, i32
  }
  func.func @transform_4(%arg0: i32) -> (i32, i32) {
    %c0_i32 = arith.constant 0 : i32
    %c0_i32_0 = arith.constant 0 : i32
    %c0_i32_1 = arith.constant 0 : i32
    return %c0_i32, %c0_i32_0 : i32, i32
  }
  func.func @transform_5(%arg0: i32) -> (i32, i32) {
    %c0_i32 = arith.constant 0 : i32
    %c0_i32_0 = arith.constant 0 : i32
    %c0_i32_1 = arith.constant 0 : i32
    return %c0_i32, %c0_i32_0 : i32, i32
  }
  func.func @transform_6(%arg0: i32) -> (i32, i32) {
    %c0_i32 = arith.constant 0 : i32
    %c0_i32_0 = arith.constant 0 : i32
    %c0_i32_1 = arith.constant 0 : i32
    return %c0_i32, %c0_i32_0 : i32, i32
  }
  func.func @transform_7(%arg0: i32) -> (i32, i32) {
    %c0_i32 = arith.constant 0 : i32
    %c0_i32_0 = arith.constant 0 : i32
    return %arg0, %c0_i32 : i32, i32
  }
}

</mosaic_0001>

<llo_original>
// kernel: tpu_custom_call.1
$region0: #{tpu_custom_call.1}
  #allocation0 [shape = 'u32[]', space=smem, size = 0x4, offset = 0x4, fixed_abs, tag = 'smem constant byte address 0x4 - core index']
  #allocation1 [shape = 'u32[72,128]{1,0:T(1,128)}', space=vmem, size = 0x9000, scoped, tag = 'internal scratch']
  %s0 = inlined_call_operand.vmem [shape: bf16[16,8], index: 0, kind: input, shape index: {}]
  %s1 = inlined_call_operand.hbm [shape: bf16[8,32], index: 1, kind: input, shape index: {}]
  %s2 = inlined_call_operand.hbm [shape: f32[1,32], index: 2, kind: input, shape index: {}]
  %s3 = inlined_call_operand.hbm [shape: bf16[32,32], index: 3, kind: input, shape index: {}]
  %s4 = inlined_call_operand.hbm [shape: f32[1,32], index: 4, kind: input, shape index: {}]
  %s5 = inlined_call_operand.vmem [shape: bf16[32,128], index: 5, kind: input, shape index: {}]
  %s6 = inlined_call_operand.vmem [shape: f32[1,128], index: 6, kind: input, shape index: {}]
  %s7 = inlined_call_operand.hbm [shape: bf16[16,128], index: 7, kind: output, shape index: {}]
  %s8 = sld [smem:[#allocation0]]
  $region54: #{tpu_custom_call.1} parent=0
    _
  %s10 = ssub.s32 1, %s8
  %s11 = scalar_select 0, %s10, %s8
  $region1: #{tpu_custom_call.1} parent=0
    #allocation2 [shape = 'u8[2048]{0}', space=vmem, size = 0x800, scoped, tag = 'input window, operand 1, single buffered']
    #allocation3 [shape = 's32[1]{0}', space=sflag, size = 0x4, scoped, tag = 'scoped memory for tpu_custom_call.1']
    #allocation4 [shape = 's32[1]{0}', space=sflag, size = 0x4, scoped, tag = 'scoped memory for tpu_custom_call.1']
    #allocation5 [shape = 'u8[512]{0}', space=vmem, size = 0x400, scoped, tag = 'input window, operand 2, single buffered']
    #allocation6 [shape = 's32[1]{0}', space=sflag, size = 0x4, scoped, tag = 'scoped memory for tpu_custom_call.1']
    #allocation7 [shape = 'u8[8192]{0}', space=vmem, size = 0x2000, scoped, tag = 'input window, operand 3, single buffered']
    #allocation8 [shape = 'u8[512]{0}', space=vmem, size = 0x400, scoped, tag = 'input window, operand 4, single buffered']
    #allocation9 [shape = 's32[1]{0}', space=sflag, size = 0x4, scoped, tag = 'scoped memory for tpu_custom_call.1']
    #allocation10 [shape = 'u8[4096]{0}', space=vmem, size = 0x1000, scoped, tag = 'output window, operand 0, single buffered']
    %12 = vsyncpa [#allocation3], 0
    %13 = vsyncpa [#allocation6], 0
    %14 = vsyncpa [#allocation9], 0
    %15 = vsyncpa [#allocation4], 0
    // Predicated region
    $region2: #{tpu_custom_call.1} parent=1 // pred_check
      _
    $region3: #{tpu_custom_call.1} parent=1 // pred_check_branch
      %17 = sbr.rel (0) target = $region5
    $region4: #{tpu_custom_call.1} parent=1 // pred_region
      _
    $region5: #{tpu_custom_call.1} parent=1 // pred_fallthru
      _
    // Predicated region
    $region6: #{tpu_custom_call.1} parent=1 // pred_check
      _
    $region7: #{tpu_custom_call.1} parent=1 // pred_check_branch
      %19 = sbr.rel (0) target = $region9
    $region8: #{tpu_custom_call.1} parent=1 // pred_region
      %21 = vsyncadd [#allocation3], 0
      %s23 = sshll.u32 %s1, 4
      %s24 = int_to_ptr.hbm [resolvable:$true] %s23
      %s25 = sshll.u32 [#allocation2], 4
      %s26 = int_to_ptr.vmem [resolvable:$true] %s25
      %28 = dma.hbm_to_vmem [thread:$0]  %s24, 64, %s26, [#allocation3]
    $region9: #{tpu_custom_call.1} parent=1 // pred_fallthru
      _
    // Predicated region
    $region10: #{tpu_custom_call.1} parent=1 // pred_check
      _
    $region11: #{tpu_custom_call.1} parent=1 // pred_check_branch
      %30 = sbr.rel (0) target = $region13
    $region12: #{tpu_custom_call.1} parent=1 // pred_region
      %32 = vsyncadd [#allocation6], 0
      %s34 = sshll.u32 %s2, 4
      %s35 = int_to_ptr.hbm [resolvable:$true] %s34
      %s36 = sshll.u32 [#allocation5], 4
      %s37 = int_to_ptr.vmem [resolvable:$true] %s36
      %39 = dma.hbm_to_vmem [thread:$0]  %s35, 16, %s37, [#allocation6]
    $region13: #{tpu_custom_call.1} parent=1 // pred_fallthru
      _
    // Predicated region
    $region14: #{tpu_custom_call.1} parent=1 // pred_check
      _
    $region15: #{tpu_custom_call.1} parent=1 // pred_check_branch
      %41 = sbr.rel (0) target = $region17
    $region16: #{tpu_custom_call.1} parent=1 // pred_region
      %43 = vsyncadd [#allocation6], 0
      %s44 = sshll.u32 %s3, 4
      %s45 = int_to_ptr.hbm [resolvable:$true] %s44
      %s46 = sshll.u32 [#allocation7], 4
      %s47 = int_to_ptr.vmem [resolvable:$true] %s46
      %52 = dma.hbm_to_vmem [thread:$0]  %s45, 256, %s47, [#allocation6], 64, 64, 4
    $region17: #{tpu_custom_call.1} parent=1 // pred_fallthru
      _
    // Predicated region
    $region18: #{tpu_custom_call.1} parent=1 // pred_check
      _
    $region19: #{tpu_custom_call.1} parent=1 // pred_check_branch
      %54 = sbr.rel (0) target = $region21
    $region20: #{tpu_custom_call.1} parent=1 // pred_region
      %56 = vsyncadd [#allocation9], 0
      %s58 = sshll.u32 %s4, 4
      %s59 = int_to_ptr.hbm [resolvable:$true] %s58
      %s60 = sshll.u32 [#allocation8], 4
      %s61 = int_to_ptr.vmem [resolvable:$true] %s60
      %63 = dma.hbm_to_vmem [thread:$0]  %s59, 16, %s61, [#allocation9]
    $region21: #{tpu_custom_call.1} parent=1 // pred_fallthru
      _
    // Predicated region
    $region22: #{tpu_custom_call.1} parent=1 // pred_check
      _
    $region23: #{tpu_custom_call.1} parent=1 // pred_check_branch
      %65 = sbr.rel (0) target = $region25
    $region24: #{tpu_custom_call.1} parent=1 // pred_region
      _
    $region25: #{tpu_custom_call.1} parent=1 // pred_fallthru
      _
    // Predicated region
    $region26: #{tpu_custom_call.1} parent=1 // pred_check
      _
    $region27: #{tpu_custom_call.1} parent=1 // pred_check_branch
      %67 = sbr.rel (0) target = $region29
    $region28: #{tpu_custom_call.1} parent=1 // pred_region
      _
    $region29: #{tpu_custom_call.1} parent=1 // pred_fallthru
      _
    // Predicated region
    $region30: #{tpu_custom_call.1} parent=1 // pred_check
      _
    $region31: #{tpu_custom_call.1} parent=1 // pred_check_branch
      %69 = sbr.rel (0) target = $region33
    $region32: #{tpu_custom_call.1} parent=1 // pred_region
      %71 = dma.done [#allocation3], 64
    $region33: #{tpu_custom_call.1} parent=1 // pred_fallthru
      _
    // Predicated region
    $region34: #{tpu_custom_call.1} parent=1 // pred_check
      _
    $region35: #{tpu_custom_call.1} parent=1 // pred_check_branch
      %73 = sbr.rel (0) target = $region37
    $region36: #{tpu_custom_call.1} parent=1 // pred_region
      %75 = dma.done [#allocation6], 16
    $region37: #{tpu_custom_call.1} parent=1 // pred_fallthru
      _
    // Predicated region
    $region38: #{tpu_custom_call.1} parent=1 // pred_check
      _
    $region39: #{tpu_custom_call.1} parent=1 // pred_check_branch
      %77 = sbr.rel (0) target = $region41
    $region40: #{tpu_custom_call.1} parent=1 // pred_region
      %79 = dma.done [#allocation6], 256
    $region41: #{tpu_custom_call.1} parent=1 // pred_fallthru
      _
    // Predicated region
    $region42: #{tpu_custom_call.1} parent=1 // pred_check
      _
    $region43: #{tpu_custom_call.1} parent=1 // pred_check_branch
      %81 = sbr.rel (0) target = $region45
    $region44: #{tpu_custom_call.1} parent=1 // pred_region
      %83 = dma.done [#allocation9], 16
    $region45: #{tpu_custom_call.1} parent=1 // pred_fallthru
      _
    %v85 = vld [vmem:[%s0] sm:$0xf]
    %v86 = vld [vmem:[%s0 + $0x4] sm:$0xf]
    %v87 = vld [vmem:[#allocation2] sm:$0xf]
    %v88 = vld [vmem:[#allocation5] sm:$0x1]
    %v90 = vperm.slane %v88, 0
    %v94 = vunpack.c.l.b16 %v85
    %v95 = vunpack.c.l.b16 %v86
    %v96 = vpack.c.b16 %v95, %v94
    %vm97 = vcmask 64512
    %v99 = vsel %vm97, %v96, 0
    %vm101 = vcmask 1043456
    %v103 = vsel %vm101, %v87, 0
    %105 = vmatpush.bf16.msra.mxu0 0
    %106 = vmatpush.bf16.msra.mxu0 0
    %107 = vmatpush.bf16.msra.mxu0 0
    %108 = vmatpush.bf16.msra.mxu0 0
    %109 = vmatpush.bf16.msra.mxu0 0
    %110 = vmatpush.bf16.msra.mxu0 0
    %111 = vmatpush.bf16.msra.mxu0 0
    %112 = vmatpush.bf16.msra.mxu0 %v103
    %113 = vmatmul.bf16.gmra.mxu0 %v99
    %v114 = vpop.f32.mrf.mxu0
    %v115 = vadd.f32 %v90, %v114
    %v116 = vpop.f32.mrf.mxu0
    %v117 = vadd.f32 %v90, %v116
    %118 = vdwg.mxu0
    %v119 = vmax.f32 %v115, 0.0
    %v120 = vmax.f32 %v117, 0.0
    %v121 = vpack.c.bf16 %v120, %v119
    %v122 = vld [vmem:[#allocation7] sm:$0xf]
    %v123 = vld [vmem:[#allocation7 + $0x4] sm:$0xf]
    %v124 = vld [vmem:[#allocation7 + $0x8] sm:$0xf]
    %v125 = vld [vmem:[#allocation7 + $0xc] sm:$0xf]
    %v126 = vld [vmem:[#allocation8] sm:$0x1]
    %v128 = vperm.slane %v126, 0
    %v134 = vunpack.c.l.b16 %v122
    %v135 = vunpack.c.l.b16 %v123
    %v136 = vunpack.c.l.b16 %v124
    %v137 = vunpack.c.l.b16 %v125
    %v138 = vpack.c.b16 %v135, %v134
    %v139 = vpack.c.b16 %v137, %v136
    %vm142 = vcmask 261120
    %v144 = vsel %vm142, %v121, 0
    %146 = vmatpush.bf16.msra.mxu0 0
    %147 = vmatpush.bf16.msra.mxu0 0
    %148 = vmatpush.bf16.msra.mxu0 0
    %149 = vmatpush.bf16.msra.mxu0 0
    %150 = vmatpush.bf16.msra.mxu0 0
    %151 = vmatpush.bf16.msra.mxu0 0
    %152 = vmatpush.bf16.msra.mxu0 %v139
    %153 = vmatpush.bf16.msra.mxu0 %v138
    %154 = vmatmul.bf16.gmra.mxu0 %v144
    %v155 = vpop.f32.mrf.mxu0
    %v156 = vadd.f32 %v128, %v155
    %v157 = vpop.f32.mrf.mxu0
    %v158 = vadd.f32 %v128, %v157
    %159 = vdwg.mxu0
    %v160 = vmax.f32 %v156, 0.0
    %v161 = vmax.f32 %v158, 0.0
    %v162 = vpack.c.bf16 %v161, %v160
    %v163 = vld [vmem:[%s5] sm:$0xf]
    %v164 = vld [vmem:[%s5 + $0x4] sm:$0xf]
    %v165 = vld [vmem:[%s5 + $0x8] sm:$0xf]
    %v166 = vld [vmem:[%s5 + $0xc] sm:$0xf]
    %v167 = vld [vmem:[%s6] sm:$0x1]
    %v169 = vperm.slane %v167, 0
    %v175 = vunpack.c.l.b16 %v163
    %v176 = vunpack.c.l.b16 %v164
    %v177 = vunpack.c.l.b16 %v165
    %v178 = vunpack.c.l.b16 %v166
    %v179 = vpack.c.b16 %v176, %v175
    %v180 = vpack.c.b16 %v178, %v177
    %v184 = vsel %vm142, %v162, 0
    %186 = vmatpush.bf16.msra.mxu0 0
    %187 = vmatpush.bf16.msra.mxu0 0
    %188 = vmatpush.bf16.msra.mxu0 0
    %189 = vmatpush.bf16.msra.mxu0 0
    %190 = vmatpush.bf16.msra.mxu0 0
    %191 = vmatpush.bf16.msra.mxu0 0
    %192 = vmatpush.bf16.msra.mxu0 %v180
    %193 = vmatpush.bf16.msra.mxu0 %v179
    %194 = vmatmul.bf16.gmra.mxu0 %v184
    %v195 = vpop.f32.mrf.mxu0
    %v196 = vadd.f32 %v169, %v195
    %v197 = vpop.f32.mrf.mxu0
    %v198 = vadd.f32 %v169, %v197
    %199 = vdwg.mxu0
    %v200 = vlaneseq
    %v201 = vand.u32 %v200, 127
    %vm202 = vcmp.lt.s32.totalorder %v201, 16
    %v203 = vmul.f32 %v196, 1.442695
    %v204 = vpow.pop %v203
    %v205 = vmul.f32 %v198, 1.442695
    %v206 = vpow.pop %v205
    %v207 = vsel %vm202, %v204, %v196
    %v208 = vsel %vm202, %v206, %v198
    %v209 = vpack.c.bf16 %v207, %v207
    %v210 = vpack.c.bf16 %v208, %v208
    %211 = vst [vmem:[#allocation10] sm:$0xf] %v209
    %212 = vst [vmem:[#allocation10 + $0x4] sm:$0xf] %v210
    // Predicated region
    $region46: #{tpu_custom_call.1} parent=1 // pred_check
      _
    $region47: #{tpu_custom_call.1} parent=1 // pred_check_branch
      %214 = sbr.rel (0) target = $region49
    $region48: #{tpu_custom_call.1} parent=1 // pred_region
      %216 = vsyncadd [#allocation4], 0
      %s217 = sshll.u32 [#allocation10], 4
      %s218 = int_to_ptr.vmem [resolvable:$true] %s217
      %s219 = sshll.u32 %s7, 4
      %s220 = int_to_ptr.hbm [resolvable:$true] %s219
      %225 = dma.vmem_to_hbm [thread:$0]  %s218, 128, %s220, [#allocation4], 64, 64, 4
    $region49: #{tpu_custom_call.1} parent=1 // pred_fallthru
      _
    // Predicated region
    $region50: #{tpu_custom_call.1} parent=1 // pred_check
      _
    $region51: #{tpu_custom_call.1} parent=1 // pred_check_branch
      %227 = sbr.rel (0) target = $region53
    $region52: #{tpu_custom_call.1} parent=1 // pred_region
      %229 = dma.done [#allocation4], 128
    $region53: #{tpu_custom_call.1} parent=1 // pred_fallthru
      _
    %230 = vsyncpa [#allocation3], 1
    %231 = vsyncpa [#allocation6], 1
    %232 = vsyncpa [#allocation9], 1
    %233 = vsyncpa [#allocation4], 1

// kernel: tpu_custom_call.1
$region0: #{tpu_custom_call.1}
  #allocation0 [shape = 'u32[]', space=smem, size = 0x4, offset = 0x4, fixed_abs, tag = 'smem constant byte address 0x4 - core index']
  #allocation1 [shape = 'u32[72,128]{1,0:T(1,128)}', space=vmem, size = 0x9000, scoped, tag = 'internal scratch']
  %s0 = inlined_call_operand.vmem [shape: bf16[16,8], index: 0, kind: input, shape index: {}]
  %s1 = inlined_call_operand.hbm [shape: bf16[8,32], index: 1, kind: input, shape index: {}]
  %s2 = inlined_call_operand.hbm [shape: f32[1,32], index: 2, kind: input, shape index: {}]
  %s3 = inlined_call_operand.hbm [shape: bf16[32,32], index: 3, kind: input, shape index: {}]
  %s4 = inlined_call_operand.hbm [shape: f32[1,32], index: 4, kind: input, shape index: {}]
  %s5 = inlined_call_operand.vmem [shape: bf16[32,128], index: 5, kind: input, shape index: {}]
  %s6 = inlined_call_operand.vmem [shape: f32[1,128], index: 6, kind: input, shape index: {}]
  %s7 = inlined_call_operand.hbm [shape: bf16[16,128], index: 7, kind: output, shape index: {}]
  %s8 = sld [smem:[#allocation0]]
  $region54: #{tpu_custom_call.1} parent=0
    _
  %s10 = ssub.s32 1, %s8
  %s11 = scalar_select 0, %s10, %s8
  $region1: #{tpu_custom_call.1} parent=0
    #allocation2 [shape = 'u8[2048]{0}', space=vmem, size = 0x800, scoped, tag = 'input window, operand 1, single buffered']
    #allocation3 [shape = 's32[1]{0}', space=sflag, size = 0x4, scoped, tag = 'scoped memory for tpu_custom_call.1']
    #allocation4 [shape = 's32[1]{0}', space=sflag, size = 0x4, scoped, tag = 'scoped memory for tpu_custom_call.1']
    #allocation5 [shape = 'u8[512]{0}', space=vmem, size = 0x400, scoped, tag = 'input window, operand 2, single buffered']
    #allocation6 [shape = 's32[1]{0}', space=sflag, size = 0x4, scoped, tag = 'scoped memory for tpu_custom_call.1']
    #allocation7 [shape = 'u8[8192]{0}', space=vmem, size = 0x2000, scoped, tag = 'input window, operand 3, single buffered']
    #allocation8 [shape = 'u8[512]{0}', space=vmem, size = 0x400, scoped, tag = 'input window, operand 4, single buffered']
    #allocation9 [shape = 's32[1]{0}', space=sflag, size = 0x4, scoped, tag = 'scoped memory for tpu_custom_call.1']
    #allocation10 [shape = 'u8[4096]{0}', space=vmem, size = 0x1000, scoped, tag = 'output window, operand 0, single buffered']
    %12 = vsyncpa [#allocation3], 0
    %13 = vsyncpa [#allocation6], 0
    %14 = vsyncpa [#allocation9], 0
    %15 = vsyncpa [#allocation4], 0
    // Predicated region
    $region2: #{tpu_custom_call.1} parent=1 // pred_check
      _
    $region3: #{tpu_custom_call.1} parent=1 // pred_check_branch
      %17 = sbr.rel (0) target = $region5
    $region4: #{tpu_custom_call.1} parent=1 // pred_region
      _
    $region5: #{tpu_custom_call.1} parent=1 // pred_fallthru
      _
    // Predicated region
    $region6: #{tpu_custom_call.1} parent=1 // pred_check
      _
    $region7: #{tpu_custom_call.1} parent=1 // pred_check_branch
      %19 = sbr.rel (0) target = $region9
    $region8: #{tpu_custom_call.1} parent=1 // pred_region
      %21 = vsyncadd [#allocation3], 0
      %s23 = sshll.u32 %s1, 4
      %s24 = int_to_ptr.hbm [resolvable:$true] %s23
      %s25 = sshll.u32 [#allocation2], 4
      %s26 = int_to_ptr.vmem [resolvable:$true] %s25
      %28 = dma.hbm_to_vmem [thread:$0]  %s24, 64, %s26, [#allocation3]
    $region9: #{tpu_custom_call.1} parent=1 // pred_fallthru
      _
    // Predicated region
    $region10: #{tpu_custom_call.1} parent=1 // pred_check
      _
    $region11: #{tpu_custom_call.1} parent=1 // pred_check_branch
      %30 = sbr.rel (0) target = $region13
    $region12: #{tpu_custom_call.1} parent=1 // pred_region
      %32 = vsyncadd [#allocation6], 0
      %s34 = sshll.u32 %s2, 4
      %s35 = int_to_ptr.hbm [resolvable:$true] %s34
      %s36 = sshll.u32 [#allocation5], 4
      %s37 = int_to_ptr.vmem [resolvable:$true] %s36
      %39 = dma.hbm_to_vmem [thread:$0]  %s35, 16, %s37, [#allocation6]
    $region13: #{tpu_custom_call.1} parent=1 // pred_fallthru
      _
    // Predicated region
    $region14: #{tpu_custom_call.1} parent=1 // pred_check
      _
    $region15: #{tpu_custom_call.1} parent=1 // pred_check_branch
      %41 = sbr.rel (0) target = $region17
    $region16: #{tpu_custom_call.1} parent=1 // pred_region
      %43 = vsyncadd [#allocation6], 0
      %s44 = sshll.u32 %s3, 4
      %s45 = int_to_ptr.hbm [resolvable:$true] %s44
      %s46 = sshll.u32 [#allocation7], 4
      %s47 = int_to_ptr.vmem [resolvable:$true] %s46
      %52 = dma.hbm_to_vmem [thread:$0]  %s45, 256, %s47, [#allocation6], 64, 64, 4
    $region17: #{tpu_custom_call.1} parent=1 // pred_fallthru
      _
    // Predicated region
    $region18: #{tpu_custom_call.1} parent=1 // pred_check
      _
    $region19: #{tpu_custom_call.1} parent=1 // pred_check_branch
      %54 = sbr.rel (0) target = $region21
    $region20: #{tpu_custom_call.1} parent=1 // pred_region
      %56 = vsyncadd [#allocation9], 0
      %s58 = sshll.u32 %s4, 4
      %s59 = int_to_ptr.hbm [resolvable:$true] %s58
      %s60 = sshll.u32 [#allocation8], 4
      %s61 = int_to_ptr.vmem [resolvable:$true] %s60
      %63 = dma.hbm_to_vmem [thread:$0]  %s59, 16, %s61, [#allocation9]
    $region21: #{tpu_custom_call.1} parent=1 // pred_fallthru
      _
    // Predicated region
    $region22: #{tpu_custom_call.1} parent=1 // pred_check
      _
    $region23: #{tpu_custom_call.1} parent=1 // pred_check_branch
      %65 = sbr.rel (0) target = $region25
    $region24: #{tpu_custom_call.1} parent=1 // pred_region
      _
    $region25: #{tpu_custom_call.1} parent=1 // pred_fallthru
      _
    // Predicated region
    $region26: #{tpu_custom_call.1} parent=1 // pred_check
      _
    $region27: #{tpu_custom_call.1} parent=1 // pred_check_branch
      %67 = sbr.rel (0) target = $region29
    $region28: #{tpu_custom_call.1} parent=1 // pred_region
      _
    $region29: #{tpu_custom_call.1} parent=1 // pred_fallthru
      _
    // Predicated region
    $region30: #{tpu_custom_call.1} parent=1 // pred_check
      _
    $region31: #{tpu_custom_call.1} parent=1 // pred_check_branch
      %69 = sbr.rel (0) target = $region33
    $region32: #{tpu_custom_call.1} parent=1 // pred_region
      %71 = dma.done [#allocation3], 64
    $region33: #{tpu_custom_call.1} parent=1 // pred_fallthru
      _
    // Predicated region
    $region34: #{tpu_custom_call.1} parent=1 // pred_check
      _
    $region35: #{tpu_custom_call.1} parent=1 // pred_check_branch
      %73 = sbr.rel (0) target = $region37
    $region36: #{tpu_custom_call.1} parent=1 // pred_region
      %75 = dma.done [#allocation6], 16
    $region37: #{tpu_custom_call.1} parent=1 // pred_fallthru
      _
    // Predicated region
    $region38: #{tpu_custom_call.1} parent=1 // pred_check
      _
    $region39: #{tpu_custom_call.1} parent=1 // pred_check_branch
      %77 = sbr.rel (0) target = $region41
    $region40: #{tpu_custom_call.1} parent=1 // pred_region
      %79 = dma.done [#allocation6], 256
    $region41: #{tpu_custom_call.1} parent=1 // pred_fallthru
      _
    // Predicated region
    $region42: #{tpu_custom_call.1} parent=1 // pred_check
      _
    $region43: #{tpu_custom_call.1} parent=1 // pred_check_branch
      %81 = sbr.rel (0) target = $region45
    $region44: #{tpu_custom_call.1} parent=1 // pred_region
      %83 = dma.done [#allocation9], 16
    $region45: #{tpu_custom_call.1} parent=1 // pred_fallthru
      _
    %v85 = vld [vmem:[%s0] sm:$0xf]
    %v86 = vld [vmem:[%s0 + $0x4] sm:$0xf]
    %v87 = vld [vmem:[#allocation2] sm:$0xf]
    %v88 = vld [vmem:[#allocation5] sm:$0x1]
    %v90 = vperm.slane %v88, 0
    %v94 = vunpack.c.l.b16 %v85
    %v95 = vunpack.c.l.b16 %v86
    %v96 = vpack.c.b16 %v95, %v94
    %vm97 = vcmask 64512
    %v99 = vsel %vm97, %v96, 0
    %vm101 = vcmask 1043456
    %v103 = vsel %vm101, %v87, 0
    %105 = vmatpush.bf16.msra.mxu0 0
    %106 = vmatpush.bf16.msra.mxu0 0
    %107 = vmatpush.bf16.msra.mxu0 0
    %108 = vmatpush.bf16.msra.mxu0 0
    %109 = vmatpush.bf16.msra.mxu0 0
    %110 = vmatpush.bf16.msra.mxu0 0
    %111 = vmatpush.bf16.msra.mxu0 0
    %112 = vmatpush.bf16.msra.mxu0 %v103
    %113 = vmatmul.bf16.gmra.mxu0 %v99
    %v114 = vpop.f32.mrf.mxu0
    %v115 = vadd.f32 %v90, %v114
    %v116 = vpop.f32.mrf.mxu0
    %v117 = vadd.f32 %v90, %v116
    %118 = vdwg.mxu0
    %v119 = vmax.f32 %v115, 0.0
    %v120 = vmax.f32 %v117, 0.0
    %v121 = vpack.c.bf16 %v120, %v119
    %v122 = vld [vmem:[#allocation7] sm:$0xf]
    %v123 = vld [vmem:[#allocation7 + $0x4] sm:$0xf]
    %v124 = vld [vmem:[#allocation7 + $0x8] sm:$0xf]
    %v125 = vld [vmem:[#allocation7 + $0xc] sm:$0xf]
    %v126 = vld [vmem:[#allocation8] sm:$0x1]
    %v128 = vperm.slane %v126, 0
    %v134 = vunpack.c.l.b16 %v122
    %v135 = vunpack.c.l.b16 %v123
    %v136 = vunpack.c.l.b16 %v124
    %v137 = vunpack.c.l.b16 %v125
    %v138 = vpack.c.b16 %v135, %v134
    %v139 = vpack.c.b16 %v137, %v136
    %vm142 = vcmask 261120
    %v144 = vsel %vm142, %v121, 0
    %146 = vmatpush.bf16.msra.mxu0 0
    %147 = vmatpush.bf16.msra.mxu0 0
    %148 = vmatpush.bf16.msra.mxu0 0
    %149 = vmatpush.bf16.msra.mxu0 0
    %150 = vmatpush.bf16.msra.mxu0 0
    %151 = vmatpush.bf16.msra.mxu0 0
    %152 = vmatpush.bf16.msra.mxu0 %v139
    %153 = vmatpush.bf16.msra.mxu0 %v138
    %154 = vmatmul.bf16.gmra.mxu0 %v144
    %v155 = vpop.f32.mrf.mxu0
    %v156 = vadd.f32 %v128, %v155
    %v157 = vpop.f32.mrf.mxu0
    %v158 = vadd.f32 %v128, %v157
    %159 = vdwg.mxu0
    %v160 = vmax.f32 %v156, 0.0
    %v161 = vmax.f32 %v158, 0.0
    %v162 = vpack.c.bf16 %v161, %v160
    %v163 = vld [vmem:[%s5] sm:$0xf]
    %v164 = vld [vmem:[%s5 + $0x4] sm:$0xf]
    %v165 = vld [vmem:[%s5 + $0x8] sm:$0xf]
    %v166 = vld [vmem:[%s5 + $0xc] sm:$0xf]
    %v167 = vld [vmem:[%s6] sm:$0x1]
    %v169 = vperm.slane %v167, 0
    %v175 = vunpack.c.l.b16 %v163
    %v176 = vunpack.c.l.b16 %v164
    %v177 = vunpack.c.l.b16 %v165
    %v178 = vunpack.c.l.b16 %v166
    %v179 = vpack.c.b16 %v176, %v175
    %v180 = vpack.c.b16 %v178, %v177
    %v184 = vsel %vm142, %v162, 0
    %186 = vmatpush.bf16.msra.mxu0 0
    %187 = vmatpush.bf16.msra.mxu0 0
    %188 = vmatpush.bf16.msra.mxu0 0
    %189 = vmatpush.bf16.msra.mxu0 0
    %190 = vmatpush.bf16.msra.mxu0 0
    %191 = vmatpush.bf16.msra.mxu0 0
    %192 = vmatpush.bf16.msra.mxu0 %v180
    %193 = vmatpush.bf16.msra.mxu0 %v179
    %194 = vmatmul.bf16.gmra.mxu0 %v184
    %v195 = vpop.f32.mrf.mxu0
    %v196 = vadd.f32 %v169, %v195
    %v197 = vpop.f32.mrf.mxu0
    %v198 = vadd.f32 %v169, %v197
    %199 = vdwg.mxu0
    %v200 = vlaneseq
    %v201 = vand.u32 %v200, 127
    %vm202 = vcmp.lt.s32.totalorder %v201, 16
    %v203 = vmul.f32 %v196, 1.442695
    %v204 = vpow.pop %v203
    %v205 = vmul.f32 %v198, 1.442695
    %v206 = vpow.pop %v205
    %v207 = vsel %vm202, %v204, %v196
    %v208 = vsel %vm202, %v206, %v198
    %v209 = vpack.c.bf16 %v207, %v207
    %v210 = vpack.c.bf16 %v208, %v208
    %211 = vst [vmem:[#allocation10] sm:$0xf] %v209
    %212 = vst [vmem:[#allocation10 + $0x4] sm:$0xf] %v210
    // Predicated region
    $region46: #{tpu_custom_call.1} parent=1 // pred_check
      _
    $region47: #{tpu_custom_call.1} parent=1 // pred_check_branch
      %214 = sbr.rel (0) target = $region49
    $region48: #{tpu_custom_call.1} parent=1 // pred_region
      %216 = vsyncadd [#allocation4], 0
      %s217 = sshll.u32 [#allocation10], 4
      %s218 = int_to_ptr.vmem [resolvable:$true] %s217
      %s219 = sshll.u32 %s7, 4
      %s220 = int_to_ptr.hbm [resolvable:$true] %s219
      %225 = dma.vmem_to_hbm [thread:$0]  %s218, 128, %s220, [#allocation4], 64, 64, 4
    $region49: #{tpu_custom_call.1} parent=1 // pred_fallthru
      _
    // Predicated region
    $region50: #{tpu_custom_call.1} parent=1 // pred_check
      _
    $region51: #{tpu_custom_call.1} parent=1 // pred_check_branch
      %227 = sbr.rel (0) target = $region53
    $region52: #{tpu_custom_call.1} parent=1 // pred_region
      %229 = dma.done [#allocation4], 128
    $region53: #{tpu_custom_call.1} parent=1 // pred_fallthru
      _
    %230 = vsyncpa [#allocation3], 1
    %231 = vsyncpa [#allocation6], 1
    %232 = vsyncpa [#allocation9], 1
    %233 = vsyncpa [#allocation4], 1

</llo_original>
